<compile_context>
chip_gen: v7x
topology: tpu7x:2x2x1
jax: 0.10.0
libtpu: 0.0.40
codegen_flags: <defaults>
</compile_context>

<pallas_src>
import functools

import jax
import jax.numpy as jnp
from jax.experimental import pallas as pl
from jax.experimental.pallas import tpu as pltpu


# -----------------------------------------------------------------------------
# helpers
# -----------------------------------------------------------------------------
def _round_up(x, m):
    return (x + m - 1) // m * m


def _divisor_tile(n, target=512):
    """Largest multiple-of-8 divisor of n that is <= target (n is %8 == 0)."""
    t = min(n, target)
    t -= t % 8
    while t >= 8:
        if n % t == 0:
            return t
        t -= 8
    return n


@functools.lru_cache(maxsize=None)
def _vmem_limit_bytes():
    # v5e/v6e: 128 MiB physical -> 96 MiB scoped; v7x: 64 MiB -> 48 MiB.
    cap = None
    try:
        cap = getattr(pltpu.get_tpu_info(), "vmem_capacity_bytes", None)
    except Exception:
        cap = None
    if not cap:
        return 48 * 1024 * 1024
    return int(min(96 * 1024 * 1024, cap * 3 // 4))


def _compiler_params(n_axes=1):
    return pltpu.CompilerParams(
        dimension_semantics=("parallel",) * n_axes,
        vmem_limit_bytes=_vmem_limit_bytes(),
    )


# -----------------------------------------------------------------------------
# Pallas kernels
# -----------------------------------------------------------------------------
def _patch_embed_kernel(p_ref, m_ref, s_ref, w_ref, b_ref, o_ref):
    # fused per-channel normalize + patch-embed matmul
    x = (p_ref[...] - m_ref[...]) * s_ref[...]
    o_ref[...] = (
        jnp.dot(x.astype(jnp.bfloat16), w_ref[...],
                preferred_element_type=jnp.float32) + b_ref[...]
    ).astype(o_ref.dtype)


def _attn_block_kernel(x_ref, g_ref, b_ref, wqkv_ref, bqkv_ref, wp_ref, bp_ref,
                       g1_ref, o_ref, qkv_scr, ctx_scr, *, heads, hd, seq_len,
                       eps):
    """LN -> fused QKV -> per-head attention -> out-proj -> LayerScale+residual
    for one batch element (softmax scale pre-folded into W_q)."""
    d3 = qkv_scr.shape[1]
    d = d3 // 3
    s_pad = x_ref.shape[0]

    x = x_ref[...].astype(jnp.float32)
    mu = jnp.mean(x, axis=-1, keepdims=True)
    var = jnp.mean(jnp.square(x - mu), axis=-1, keepdims=True)
    y = ((x - mu) * jax.lax.rsqrt(var + eps) * g_ref[...] + b_ref[...]
         ).astype(jnp.bfloat16)

    # Single [S_pad, 3D] MXU pass, stored once in a bf16 VMEM scratch.
    qkv = jnp.dot(y, wqkv_ref[...], preferred_element_type=jnp.float32) \
        + bqkv_ref[...]
    qkv_scr[...] = qkv.astype(jnp.bfloat16)

    kidx = jax.lax.broadcasted_iota(jnp.int32, (1, s_pad), 1)
    kmask = kidx < seq_len  # mask padded key positions

    # Static head loop: each head writes a bf16 slice of the context scratch;
    # no f32 accumulator is carried across iterations (scores die per head).
    for h in range(heads):
        lo = h * hd
        qh = qkv_scr[:, lo:lo + hd]
        kh = qkv_scr[:, d + lo:d + lo + hd]
        vh = qkv_scr[:, 2 * d + lo:2 * d + lo + hd]
        s = jax.lax.dot_general(qh, kh, (((1,), (1,)), ((), ())),
                                preferred_element_type=jnp.float32)
        s = jnp.where(kmask, s, jnp.float32(-1e30))
        m = jnp.max(s, axis=-1, keepdims=True)
        p = jnp.exp(s - m)
        p = p * pl.reciprocal(jnp.sum(p, axis=-1, keepdims=True), approx=True)
        ctx_scr[:, lo:lo + hd] = jnp.dot(
            p.astype(jnp.bfloat16), vh,
            preferred_element_type=jnp.float32).astype(jnp.bfloat16)

    # One K=D out-projection over the full context (full MXU depth).
    proj = jnp.dot(ctx_scr[...], wp_ref[...],
                   preferred_element_type=jnp.float32) + bp_ref[...]
    o_ref[...] = x + g1_ref[...] * proj  # LayerScale + residual


def _ln_mlp_kernel(x_ref, g_ref, b_ref, w1_ref, b1_ref, w2_ref, b2_ref,
                   g2_ref, o_ref, *, eps):
    x = x_ref[...].astype(jnp.float32)
    mu = jnp.mean(x, axis=-1, keepdims=True)
    var = jnp.mean(jnp.square(x - mu), axis=-1, keepdims=True)
    y = ((x - mu) * jax.lax.rsqrt(var + eps) * g_ref[...] + b_ref[...]
         ).astype(jnp.bfloat16)
    h = jnp.dot(y, w1_ref[...], preferred_element_type=jnp.float32) + b1_ref[...]
    h = jax.nn.gelu(h, approximate=False)  # exact erf, matches torch nn.GELU()
    m = jnp.dot(h.astype(jnp.bfloat16), w2_ref[...],
                preferred_element_type=jnp.float32) + b2_ref[...]
    o_ref[...] = x + g2_ref[...] * m  # LayerScale + residual


def _layernorm_kernel(x_ref, g_ref, b_ref, o_ref, *, eps):
    x = x_ref[...].astype(jnp.float32)
    mu = jnp.mean(x, axis=-1, keepdims=True)
    var = jnp.mean(jnp.square(x - mu), axis=-1, keepdims=True)
    o_ref[...] = ((x - mu) * jax.lax.rsqrt(var + eps) * g_ref[...]
                  + b_ref[...]).astype(o_ref.dtype)


# -----------------------------------------------------------------------------
# pallas_call wrappers (row-tiled grids, resident bf16 weights)
# -----------------------------------------------------------------------------
def patch_embed(patches, mean_row, inv_std_row, w, b, *, row_tile):
    m, kp = patches.shape
    d = w.shape[1]
    assert m % row_tile == 0
    row = lambda i: (i, 0)
    full = lambda i: (0, 0)
    return pl.pallas_call(
        _patch_embed_kernel,
        out_shape=jax.ShapeDtypeStruct((m, d), jnp.float32),
        grid=(m // row_tile,),
        in_specs=[
            pl.BlockSpec((row_tile, kp), row),
            pl.BlockSpec((1, kp), full),
            pl.BlockSpec((1, kp), full),
            pl.BlockSpec((kp, d), full),
            pl.BlockSpec((1, d), full),
        ],
        out_specs=pl.BlockSpec((row_tile, d), row),
        compiler_params=_compiler_params(),
    )(patches, mean_row, inv_std_row, w, b.reshape(1, d))


def attn_block(x, g, b, wqkv, bqkv, wp, bp, gamma1, *, batch, s_pad, heads,
               seq_len, eps=1e-6):
    m, d = x.shape
    d3 = wqkv.shape[1]
    hd = d // heads
    assert m == batch * s_pad
    seq_blk = lambda i: (i, 0)
    full = lambda i: (0, 0)
    return pl.pallas_call(
        functools.partial(_attn_block_kernel, heads=heads, hd=hd,
                          seq_len=seq_len, eps=eps),
        out_shape=jax.ShapeDtypeStruct((m, d), jnp.float32),
        grid=(batch,),
        in_specs=[
            pl.BlockSpec((s_pad, d), seq_blk),   # residual stream
            pl.BlockSpec((1, d), full),          # ln1 gamma
            pl.BlockSpec((1, d), full),          # ln1 beta
            pl.BlockSpec((d, d3), full),         # fused W_qkv (scale folded)
            pl.BlockSpec((1, d3), full),         # fused b_qkv
            pl.BlockSpec((d, d), full),          # W_proj
            pl.BlockSpec((1, d), full),          # b_proj
            pl.BlockSpec((1, d), full),          # LayerScale gamma1
        ],
        out_specs=pl.BlockSpec((s_pad, d), seq_blk),
        scratch_shapes=[pltpu.VMEM((s_pad, d3), jnp.bfloat16),
                        pltpu.VMEM((s_pad, d), jnp.bfloat16)],
        compiler_params=_compiler_params(),
    )(x, g.reshape(1, d), b.reshape(1, d), wqkv, bqkv.reshape(1, d3),
      wp, bp.reshape(1, d), gamma1.reshape(1, d))


def ln_mlp_residual(x, g, b, w1, b1, w2, b2, gamma2, *, row_tile, eps=1e-6):
    m, d = x.shape
    dh = w1.shape[1]
    assert m % row_tile == 0
    row = lambda i: (i, 0)
    full = lambda i: (0, 0)
    return pl.pallas_call(
        functools.partial(_ln_mlp_kernel, eps=eps),
        out_shape=jax.ShapeDtypeStruct((m, d), jnp.float32),
        grid=(m // row_tile,),
        in_specs=[
            pl.BlockSpec((row_tile, d), row),
            pl.BlockSpec((1, d), full), pl.BlockSpec((1, d), full),
            pl.BlockSpec((d, dh), full), pl.BlockSpec((1, dh), full),
            pl.BlockSpec((dh, d), full), pl.BlockSpec((1, d), full),
            pl.BlockSpec((1, d), full),
        ],
        out_specs=pl.BlockSpec((row_tile, d), row),
        compiler_params=_compiler_params(),
    )(x, g.reshape(1, d), b.reshape(1, d), w1, b1.reshape(1, dh),
      w2, b2.reshape(1, d), gamma2.reshape(1, d))


def layernorm(x, g, b, eps=1e-6):
    m, d = x.shape
    full = lambda i: (0, 0)
    return pl.pallas_call(
        functools.partial(_layernorm_kernel, eps=eps),
        out_shape=jax.ShapeDtypeStruct((m, d), x.dtype),
        grid=(1,),
        in_specs=[pl.BlockSpec((m, d), full),
                  pl.BlockSpec((1, d), full),
                  pl.BlockSpec((1, d), full)],
        out_specs=pl.BlockSpec((m, d), full),
        compiler_params=_compiler_params(),
    )(x, g.reshape(1, d), b.reshape(1, d))


# -----------------------------------------------------------------------------
# Parameter init (deterministic, synthetic — stands in for the DINOv2 checkpoint)
# -----------------------------------------------------------------------------
def init_params(key, *, C, P, D, heads, depth, num_patches, mlp_ratio=4):
    assert C == 3, "ImageNet normalization stats are 3-channel"

    def nrm(k, shape, scale=0.02):
        return (scale * jax.random.normal(k, shape)).astype(jnp.float32)

    K = C * P * P
    K_pad = _round_up(K, 128)
    keys = jax.random.split(key, 6 + depth)
    Dh = mlp_ratio * D
    hd = D // heads
    attn_scale = float(hd) ** -0.5

    # patch-embed conv weight [D, C, P, P] -> matmul weight [K, D], K zero-padded
    patch_w = nrm(keys[0], (D, C, P, P)).reshape(D, K).T
    patch_w = jnp.pad(patch_w, ((0, K_pad - K), (0, 0))).astype(jnp.bfloat16)

    mean = jnp.array([0.485, 0.456, 0.406], jnp.float32)
    std = jnp.array([0.229, 0.224, 0.225], jnp.float32)
    mean_row = jnp.pad(jnp.repeat(mean, P * P), (0, K_pad - K)).reshape(1, K_pad)
    inv_std_row = jnp.pad(jnp.repeat(1.0 / std, P * P),
                          (0, K_pad - K)).reshape(1, K_pad)

    params = {
        "patch_w": patch_w,
        "patch_b": jnp.zeros((D,), jnp.float32),
        "norm_mean_row": mean_row,
        "norm_inv_std_row": inv_std_row,
        "cls_token": nrm(keys[1], (1, 1, D)),
        "pos_embed": nrm(keys[2], (1, num_patches + 1, D)),
        "norm_g": jnp.ones((D,), jnp.float32),
        "norm_b": jnp.zeros((D,), jnp.float32),
        "blocks": [],
    }
    for i in range(depth):
        bk = jax.random.split(keys[6 + i], 6)
        # softmax 1/sqrt(hd) folded into W_q (and b_q) at init
        w_q = nrm(bk[0], (D, D)) * attn_scale
        w_k = nrm(bk[1], (D, D))
        w_v = nrm(bk[2], (D, D))
        w_qkv = jnp.concatenate([w_q, w_k, w_v], axis=1).astype(jnp.bfloat16)
        b_qkv = jnp.concatenate([
            jnp.zeros((D,), jnp.float32) * attn_scale,  # pre-scaled q bias
            jnp.zeros((D,), jnp.float32),
            jnp.zeros((D,), jnp.float32),
        ])
        params["blocks"].append(
            {
                "ln1_g": jnp.ones((D,), jnp.float32),
                "ln1_b": jnp.zeros((D,), jnp.float32),
                "w_qkv": w_qkv,
                "b_qkv": b_qkv,
                "w_proj": nrm(bk[3], (D, D)).astype(jnp.bfloat16),
                "b_proj": jnp.zeros((D,), jnp.float32),
                "gamma1": jnp.full((D,), 1.0, jnp.float32),  # LayerScale
                "ln2_g": jnp.ones((D,), jnp.float32),
                "ln2_b": jnp.zeros((D,), jnp.float32),
                "w_fc1": nrm(bk[4], (D, Dh)).astype(jnp.bfloat16),
                "b_fc1": jnp.zeros((Dh,), jnp.float32),
                "w_fc2": nrm(bk[5], (Dh, D)).astype(jnp.bfloat16),
                "b_fc2": jnp.zeros((D,), jnp.float32),
                "gamma2": jnp.full((D,), 1.0, jnp.float32),
            }
        )
    return params


# -----------------------------------------------------------------------------
# Forward pass
# -----------------------------------------------------------------------------
def encode(image, params, *, P, heads):
    B, C, H, W = image.shape
    Hn, Wn = H // P, W // P
    N = Hn * Wn
    K = C * P * P
    K_pad = params["patch_w"].shape[0]
    D = params["patch_w"].shape[1]

    # Patch extraction (stride-P conv == per-patch matmul); normalization is
    # fused into the patch-embed kernel via mean/inv_std rows.
    patches = (
        image.reshape(B, C, Hn, P, Wn, P)
        .transpose(0, 2, 4, 1, 3, 5)
        .reshape(B * N, K)
    )
    BN = B * N
    pe_tile = 512 if BN >= 512 else _round_up(BN, 8)
    BN_pad = _round_up(BN, pe_tile)          # rows padded to a tile multiple
    patches = jnp.pad(patches, ((0, BN_pad - BN), (0, K_pad - K)))
    tok = patch_embed(patches, params["norm_mean_row"],
                      params["norm_inv_std_row"],
                      params["patch_w"], params["patch_b"], row_tile=pe_tile)
    tok = tok[:BN].reshape(B, N, D)

    # Prepend CLS, add positional embedding, pad sequence to a multiple of 8.
    cls = jnp.broadcast_to(params["cls_token"], (B, 1, D)).astype(jnp.float32)
    tok = jnp.concatenate([cls, tok], axis=1) + params["pos_embed"]
    S = N + 1
    S_pad = _round_up(S, 8)
    tok = jnp.pad(tok, ((0, 0), (0, S_pad - S), (0, 0)))
    xt = tok.reshape(B * S_pad, D)  # residual stream, f32

    # MLP row tile divides S_pad (hence B*S_pad) -> clean tiling, no junk rows.
    mlp_tile = _divisor_tile(S_pad, target=512)

    for blk in params["blocks"]:
        xt = attn_block(xt, blk["ln1_g"], blk["ln1_b"],
                        blk["w_qkv"], blk["b_qkv"],
                        blk["w_proj"], blk["b_proj"], blk["gamma1"],
                        batch=B, s_pad=S_pad, heads=heads, seq_len=S)
        xt = ln_mlp_residual(xt, blk["ln2_g"], blk["ln2_b"],
                             blk["w_fc1"], blk["b_fc1"],
                             blk["w_fc2"], blk["b_fc2"], blk["gamma2"],
                             row_tile=mlp_tile)

    # Final LayerNorm applied only to the CLS rows (LN is per-row).
    cls_tok = xt.reshape(B, S_pad, D)[:, 0, :]
    return layernorm(cls_tok, params["norm_g"], params["norm_b"])


# -----------------------------------------------------------------------------
if __name__ == "__main__":
    # Small shapes consistent with ViT-B/14 structure (patch size 14 kept).
    B, C, IMG, P = 2, 3, 28, 14          # 2x2 = 4 patches -> S = 5
    D, HEADS, DEPTH = 32, 4, 2           # tiny ViT stand-in

    key = jax.random.PRNGKey(0)
    k_img, k_par = jax.random.split(key)

    # Synthetic image in [0, 1] (what transforms.ToTensor() produces).
    image = jax.random.uniform(k_img, (B, C, IMG, IMG), dtype=jnp.float32)

    num_patches = (IMG // P) ** 2
    params = init_params(
        k_par, C=C, P=P, D=D, heads=HEADS, depth=DEPTH, num_patches=num_patches
    )

    feats = encode(image, params, P=P, heads=HEADS)
    feats = jax.block_until_ready(feats)
    assert feats.shape == (B, D) and feats.dtype == jnp.float32
    assert bool(jnp.all(jnp.isfinite(feats)))
    print("KERNEL_OK")
</pallas_src>

<mosaic_0001>
module attributes {stable_mosaic.version = 11 : i64} {
  func.func @_patch_embed_kernel(%arg0: i32, %arg1: memref<8x640xf32, #tpu.memory_space<vmem>>, %arg2: memref<1x640xf32, #tpu.memory_space<vmem>>, %arg3: memref<1x640xf32, #tpu.memory_space<vmem>>, %arg4: memref<640x32xbf16, #tpu.memory_space<vmem>>, %arg5: memref<1x32xf32, #tpu.memory_space<vmem>>, %arg6: memref<8x32xf32, #tpu.memory_space<vmem>>) attributes {dimension_semantics = [#tpu.dimension_semantics<parallel>], iteration_bounds = array<i64: 1>, scalar_prefetch = 0 : i64, scratch_operands = 0 : i64, tpu.core_type = #tpu.core_type<tc>, window_params = [{transform_indices = @transform_0, window_bounds = array<i64: 8, 640>}, {pipeline_mode = #tpu.pipeline_mode<synchronous>, transform_indices = @transform_1, window_bounds = array<i64: 1, 640>}, {pipeline_mode = #tpu.pipeline_mode<synchronous>, transform_indices = @transform_2, window_bounds = array<i64: 1, 640>}, {pipeline_mode = #tpu.pipeline_mode<synchronous>, transform_indices = @transform_3, window_bounds = array<i64: 640, 32>}, {pipeline_mode = #tpu.pipeline_mode<synchronous>, transform_indices = @transform_4, window_bounds = array<i64: 1, 32>}, {transform_indices = @transform_5, window_bounds = array<i64: 8, 32>}]} {
    %c0 = arith.constant 0 : index
    %c0_0 = arith.constant 0 : index
    %0 = vector.load %arg1[%c0, %c0_0] : memref<8x640xf32, #tpu.memory_space<vmem>>, vector<8x640xf32>
    %c0_1 = arith.constant 0 : index
    %c0_2 = arith.constant 0 : index
    %1 = vector.load %arg2[%c0_1, %c0_2] : memref<1x640xf32, #tpu.memory_space<vmem>>, vector<1x640xf32>
    %2 = vector.broadcast %1 : vector<1x640xf32> to vector<8x640xf32>
    %3 = arith.subf %0, %2 : vector<8x640xf32>
    %c0_3 = arith.constant 0 : index
    %c0_4 = arith.constant 0 : index
    %4 = vector.load %arg3[%c0_3, %c0_4] : memref<1x640xf32, #tpu.memory_space<vmem>>, vector<1x640xf32>
    %5 = vector.broadcast %4 : vector<1x640xf32> to vector<8x640xf32>
    %6 = arith.mulf %3, %5 : vector<8x640xf32>
    %7 = arith.truncf %6 : vector<8x640xf32> to vector<8x640xbf16>
    %c0_5 = arith.constant 0 : index
    %c0_6 = arith.constant 0 : index
    %8 = vector.load %arg4[%c0_5, %c0_6] : memref<640x32xbf16, #tpu.memory_space<vmem>>, vector<640x32xbf16>
    %cst = arith.constant dense<0.000000e+00> : vector<8x32xf32>
    %9 = tpu.matmul %7, %8, %cst {dimension_numbers = #tpu.dot_dimension_numbers<[1], [0], [0], [1], [0, 0, 1, 1], [], []>} : vector<8x640xbf16>, vector<640x32xbf16>, vector<8x32xf32> -> vector<8x32xf32>
    %c0_7 = arith.constant 0 : index
    %c0_8 = arith.constant 0 : index
    %10 = vector.load %arg5[%c0_7, %c0_8] : memref<1x32xf32, #tpu.memory_space<vmem>>, vector<1x32xf32>
    %11 = vector.broadcast %10 : vector<1x32xf32> to vector<8x32xf32>
    %12 = arith.addf %9, %11 : vector<8x32xf32>
    %c0_9 = arith.constant 0 : index
    %c0_10 = arith.constant 0 : index
    %13 = vector.load %arg6[%c0_9, %c0_10] : memref<8x32xf32, #tpu.memory_space<vmem>>, vector<8x32xf32>
    tpu.vector_store %arg6[%c0_9, %c0_10], %12 {strides = array<i32>} : memref<8x32xf32, #tpu.memory_space<vmem>>, vector<8x32xf32>,
    return
  }
  func.func @transform_0(%arg0: i32) -> (i32, i32) {
    %c0_i32 = arith.constant 0 : i32
    %c0_i32_0 = arith.constant 0 : i32
    return %arg0, %c0_i32 : i32, i32
  }
  func.func @transform_1(%arg0: i32) -> (i32, i32) {
    %c0_i32 = arith.constant 0 : i32
    %c0_i32_0 = arith.constant 0 : i32
    %c0_i32_1 = arith.constant 0 : i32
    return %c0_i32, %c0_i32_0 : i32, i32
  }
  func.func @transform_2(%arg0: i32) -> (i32, i32) {
    %c0_i32 = arith.constant 0 : i32
    %c0_i32_0 = arith.constant 0 : i32
    %c0_i32_1 = arith.constant 0 : i32
    return %c0_i32, %c0_i32_0 : i32, i32
  }
  func.func @transform_3(%arg0: i32) -> (i32, i32) {
    %c0_i32 = arith.constant 0 : i32
    %c0_i32_0 = arith.constant 0 : i32
    %c0_i32_1 = arith.constant 0 : i32
    return %c0_i32, %c0_i32_0 : i32, i32
  }
  func.func @transform_4(%arg0: i32) -> (i32, i32) {
    %c0_i32 = arith.constant 0 : i32
    %c0_i32_0 = arith.constant 0 : i32
    %c0_i32_1 = arith.constant 0 : i32
    return %c0_i32, %c0_i32_0 : i32, i32
  }
  func.func @transform_5(%arg0: i32) -> (i32, i32) {
    %c0_i32 = arith.constant 0 : i32
    %c0_i32_0 = arith.constant 0 : i32
    return %arg0, %c0_i32 : i32, i32
  }
}

</mosaic_0001>

<llo_original>
// kernel: tpu_custom_call.1
$region0: #{tpu_custom_call.1}
  #allocation0 [shape = 'u32[]', space=smem, size = 0x4, offset = 0x4, fixed_abs, tag = 'smem constant byte address 0x4 - core index']
  #allocation1 [shape = 'u32[144,128]{1,0:T(1,128)}', space=vmem, size = 0x12000, scoped, tag = 'internal scratch']
  %s0 = inlined_call_operand.vmem [shape: f32[8,640], index: 0, kind: input, shape index: {}]
  %s1 = inlined_call_operand.vmem [shape: f32[1,640], index: 1, kind: input, shape index: {}]
  %s2 = inlined_call_operand.vmem [shape: f32[1,640], index: 2, kind: input, shape index: {}]
  %s3 = inlined_call_operand.vmem [shape: bf16[640,32], index: 3, kind: input, shape index: {}]
  %s4 = inlined_call_operand.vmem [shape: f32[1,32], index: 4, kind: input, shape index: {}]
  %s5 = inlined_call_operand.hbm [shape: f32[8,32], index: 5, kind: output, shape index: {}]
  %s6 = sld [smem:[#allocation0]]
  $region30: #{tpu_custom_call.1} parent=0
    _
  %s8 = ssub.s32 1, %s6
  %s9 = scalar_select 0, %s8, %s6
  $region1: #{tpu_custom_call.1} parent=0
    #allocation2 [shape = 'u8[4096]{0}', space=vmem, size = 0x1000, scoped, tag = 'output window, operand 0, single buffered']
    #allocation3 [shape = 's32[1]{0}', space=sflag, size = 0x4, scoped, tag = 'scoped memory for tpu_custom_call.1']
    %10 = vsyncpa [#allocation3], 0
    // Predicated region
    $region2: #{tpu_custom_call.1} parent=1 // pred_check
      _
    $region3: #{tpu_custom_call.1} parent=1 // pred_check_branch
      %12 = sbr.rel (0) target = $region5
    $region4: #{tpu_custom_call.1} parent=1 // pred_region
      _
    $region5: #{tpu_custom_call.1} parent=1 // pred_fallthru
      _
    // Predicated region
    $region6: #{tpu_custom_call.1} parent=1 // pred_check
      _
    $region7: #{tpu_custom_call.1} parent=1 // pred_check_branch
      %14 = sbr.rel (0) target = $region9
    $region8: #{tpu_custom_call.1} parent=1 // pred_region
      _
    $region9: #{tpu_custom_call.1} parent=1 // pred_fallthru
      _
    // Predicated region
    $region10: #{tpu_custom_call.1} parent=1 // pred_check
      _
    $region11: #{tpu_custom_call.1} parent=1 // pred_check_branch
      %16 = sbr.rel (0) target = $region13
    $region12: #{tpu_custom_call.1} parent=1 // pred_region
      _
    $region13: #{tpu_custom_call.1} parent=1 // pred_fallthru
      _
    // Predicated region
    $region14: #{tpu_custom_call.1} parent=1 // pred_check
      _
    $region15: #{tpu_custom_call.1} parent=1 // pred_check_branch
      %18 = sbr.rel (0) target = $region17
    $region16: #{tpu_custom_call.1} parent=1 // pred_region
      _
    $region17: #{tpu_custom_call.1} parent=1 // pred_fallthru
      _
    // Predicated region
    $region18: #{tpu_custom_call.1} parent=1 // pred_check
      _
    $region19: #{tpu_custom_call.1} parent=1 // pred_check_branch
      %20 = sbr.rel (0) target = $region21
    $region20: #{tpu_custom_call.1} parent=1 // pred_region
      _
    $region21: #{tpu_custom_call.1} parent=1 // pred_fallthru
      _
    %v22 = vld [vmem:[%s0] sm:$0xff]
    %v23 = vld [vmem:[%s0 + $0x8] sm:$0xff]
    %v24 = vld [vmem:[%s0 + $0x10] sm:$0xff]
    %v25 = vld [vmem:[%s0 + $0x18] sm:$0xff]
    %v26 = vld [vmem:[%s0 + $0x20] sm:$0xff]
    %v27 = vld [vmem:[%s1] sm:$0x1f]
    %v29 = vlaneseq
    %v30 = vshrl.u32 %v29, 7
    %v31 = vsub.s32 0, %v30
    %v32 = vrot.slane %v27, %v31
    %v33 = vlaneseq
    %v34 = vshrl.u32 %v33, 7
    %v35 = vsub.s32 1, %v34
    %v36 = vrot.slane %v27, %v35
    %v37 = vlaneseq
    %v38 = vshrl.u32 %v37, 7
    %v39 = vsub.s32 2, %v38
    %v40 = vrot.slane %v27, %v39
    %v41 = vlaneseq
    %v42 = vshrl.u32 %v41, 7
    %v43 = vsub.s32 3, %v42
    %v44 = vrot.slane %v27, %v43
    %v45 = vlaneseq
    %v46 = vshrl.u32 %v45, 7
    %v47 = vsub.s32 4, %v46
    %v48 = vrot.slane %v27, %v47
    %v54 = vsub.f32 %v22, %v32
    %v55 = vsub.f32 %v23, %v36
    %v56 = vsub.f32 %v24, %v40
    %v57 = vsub.f32 %v25, %v44
    %v58 = vsub.f32 %v26, %v48
    %v59 = vld [vmem:[%s2] sm:$0x1f]
    %v61 = vlaneseq
    %v62 = vshrl.u32 %v61, 7
    %v63 = vsub.s32 0, %v62
    %v64 = vrot.slane %v59, %v63
    %v65 = vlaneseq
    %v66 = vshrl.u32 %v65, 7
    %v67 = vsub.s32 1, %v66
    %v68 = vrot.slane %v59, %v67
    %v69 = vlaneseq
    %v70 = vshrl.u32 %v69, 7
    %v71 = vsub.s32 2, %v70
    %v72 = vrot.slane %v59, %v71
    %v73 = vlaneseq
    %v74 = vshrl.u32 %v73, 7
    %v75 = vsub.s32 3, %v74
    %v76 = vrot.slane %v59, %v75
    %v77 = vlaneseq
    %v78 = vshrl.u32 %v77, 7
    %v79 = vsub.s32 4, %v78
    %v80 = vrot.slane %v59, %v79
    %v86 = vmul.f32 %v54, %v64
    %v87 = vmul.f32 %v55, %v68
    %v88 = vmul.f32 %v56, %v72
    %v89 = vmul.f32 %v57, %v76
    %v90 = vmul.f32 %v58, %v80
    %v91 = vpack.c.bf16 %v86, %v86
    %v92 = vpack.c.bf16 %v87, %v87
    %v93 = vpack.c.bf16 %v88, %v88
    %v94 = vpack.c.bf16 %v89, %v89
    %v95 = vpack.c.bf16 %v90, %v90
    %v96 = vld [vmem:[%s3] sm:$0xf]
    %v97 = vld [vmem:[%s3 + $0x4] sm:$0xf]
    %v98 = vld [vmem:[%s3 + $0x8] sm:$0xf]
    %v99 = vld [vmem:[%s3 + $0xc] sm:$0xf]
    %v100 = vld [vmem:[%s3 + $0x10] sm:$0xf]
    %v101 = vld [vmem:[%s3 + $0x14] sm:$0xf]
    %v102 = vld [vmem:[%s3 + $0x18] sm:$0xf]
    %v103 = vld [vmem:[%s3 + $0x1c] sm:$0xf]
    %v104 = vld [vmem:[%s3 + $0x20] sm:$0xf]
    %v105 = vld [vmem:[%s3 + $0x24] sm:$0xf]
    %v106 = vld [vmem:[%s3 + $0x28] sm:$0xf]
    %v107 = vld [vmem:[%s3 + $0x2c] sm:$0xf]
    %v108 = vld [vmem:[%s3 + $0x30] sm:$0xf]
    %v109 = vld [vmem:[%s3 + $0x34] sm:$0xf]
    %v110 = vld [vmem:[%s3 + $0x38] sm:$0xf]
    %v111 = vld [vmem:[%s3 + $0x3c] sm:$0xf]
    %v112 = vld [vmem:[%s3 + $0x40] sm:$0xf]
    %v113 = vld [vmem:[%s3 + $0x44] sm:$0xf]
    %v114 = vld [vmem:[%s3 + $0x48] sm:$0xf]
    %v115 = vld [vmem:[%s3 + $0x4c] sm:$0xf]
    %v116 = vld [vmem:[%s3 + $0x50] sm:$0xf]
    %v117 = vld [vmem:[%s3 + $0x54] sm:$0xf]
    %v118 = vld [vmem:[%s3 + $0x58] sm:$0xf]
    %v119 = vld [vmem:[%s3 + $0x5c] sm:$0xf]
    %v120 = vld [vmem:[%s3 + $0x60] sm:$0xf]
    %v121 = vld [vmem:[%s3 + $0x64] sm:$0xf]
    %v122 = vld [vmem:[%s3 + $0x68] sm:$0xf]
    %v123 = vld [vmem:[%s3 + $0x6c] sm:$0xf]
    %v124 = vld [vmem:[%s3 + $0x70] sm:$0xf]
    %v125 = vld [vmem:[%s3 + $0x74] sm:$0xf]
    %v126 = vld [vmem:[%s3 + $0x78] sm:$0xf]
    %v127 = vld [vmem:[%s3 + $0x7c] sm:$0xf]
    %v128 = vld [vmem:[%s3 + $0x80] sm:$0xf]
    %v129 = vld [vmem:[%s3 + $0x84] sm:$0xf]
    %v130 = vld [vmem:[%s3 + $0x88] sm:$0xf]
    %v131 = vld [vmem:[%s3 + $0x8c] sm:$0xf]
    %v132 = vld [vmem:[%s3 + $0x90] sm:$0xf]
    %v133 = vld [vmem:[%s3 + $0x94] sm:$0xf]
    %v134 = vld [vmem:[%s3 + $0x98] sm:$0xf]
    %v135 = vld [vmem:[%s3 + $0x9c] sm:$0xf]
    %v136 = vld [vmem:[%s3 + $0xa0] sm:$0xf]
    %v137 = vld [vmem:[%s3 + $0xa4] sm:$0xf]
    %v138 = vld [vmem:[%s3 + $0xa8] sm:$0xf]
    %v139 = vld [vmem:[%s3 + $0xac] sm:$0xf]
    %v140 = vld [vmem:[%s3 + $0xb0] sm:$0xf]
    %v141 = vld [vmem:[%s3 + $0xb4] sm:$0xf]
    %v142 = vld [vmem:[%s3 + $0xb8] sm:$0xf]
    %v143 = vld [vmem:[%s3 + $0xbc] sm:$0xf]
    %v144 = vld [vmem:[%s3 + $0xc0] sm:$0xf]
    %v145 = vld [vmem:[%s3 + $0xc4] sm:$0xf]
    %v146 = vld [vmem:[%s3 + $0xc8] sm:$0xf]
    %v147 = vld [vmem:[%s3 + $0xcc] sm:$0xf]
    %v148 = vld [vmem:[%s3 + $0xd0] sm:$0xf]
    %v149 = vld [vmem:[%s3 + $0xd4] sm:$0xf]
    %v150 = vld [vmem:[%s3 + $0xd8] sm:$0xf]
    %v151 = vld [vmem:[%s3 + $0xdc] sm:$0xf]
    %v152 = vld [vmem:[%s3 + $0xe0] sm:$0xf]
    %v153 = vld [vmem:[%s3 + $0xe4] sm:$0xf]
    %v154 = vld [vmem:[%s3 + $0xe8] sm:$0xf]
    %v155 = vld [vmem:[%s3 + $0xec] sm:$0xf]
    %v156 = vld [vmem:[%s3 + $0xf0] sm:$0xf]
    %v157 = vld [vmem:[%s3 + $0xf4] sm:$0xf]
    %v158 = vld [vmem:[%s3 + $0xf8] sm:$0xf]
    %v159 = vld [vmem:[%s3 + $0xfc] sm:$0xf]
    %v160 = vld [vmem:[%s3 + $0x100] sm:$0xf]
    %v161 = vld [vmem:[%s3 + $0x104] sm:$0xf]
    %v162 = vld [vmem:[%s3 + $0x108] sm:$0xf]
    %v163 = vld [vmem:[%s3 + $0x10c] sm:$0xf]
    %v164 = vld [vmem:[%s3 + $0x110] sm:$0xf]
    %v165 = vld [vmem:[%s3 + $0x114] sm:$0xf]
    %v166 = vld [vmem:[%s3 + $0x118] sm:$0xf]
    %v167 = vld [vmem:[%s3 + $0x11c] sm:$0xf]
    %v168 = vld [vmem:[%s3 + $0x120] sm:$0xf]
    %v169 = vld [vmem:[%s3 + $0x124] sm:$0xf]
    %v170 = vld [vmem:[%s3 + $0x128] sm:$0xf]
    %v171 = vld [vmem:[%s3 + $0x12c] sm:$0xf]
    %v172 = vld [vmem:[%s3 + $0x130] sm:$0xf]
    %v173 = vld [vmem:[%s3 + $0x134] sm:$0xf]
    %v174 = vld [vmem:[%s3 + $0x138] sm:$0xf]
    %v175 = vld [vmem:[%s3 + $0x13c] sm:$0xf]
    %v176 = vld [vmem:[%s4] sm:$0x1]
    %v178 = vlaneseq
    %v179 = vshrl.u32 %v178, 7
    %v180 = vsub.s32 0, %v179
    %v181 = vrot.slane %v176, %v180
    %v263 = vunpack.c.l.b16 %v96
    %v264 = vunpack.c.l.b16 %v97
    %v265 = vunpack.c.l.b16 %v98
    %v266 = vunpack.c.l.b16 %v99
    %v267 = vunpack.c.l.b16 %v100
    %v268 = vunpack.c.l.b16 %v101
    %v269 = vunpack.c.l.b16 %v102
    %v270 = vunpack.c.l.b16 %v103
    %v271 = vunpack.c.l.b16 %v104
    %v272 = vunpack.c.l.b16 %v105
    %v273 = vunpack.c.l.b16 %v106
    %v274 = vunpack.c.l.b16 %v107
    %v275 = vunpack.c.l.b16 %v108
    %v276 = vunpack.c.l.b16 %v109
    %v277 = vunpack.c.l.b16 %v110
    %v278 = vunpack.c.l.b16 %v111
    %v279 = vunpack.c.l.b16 %v112
    %v280 = vunpack.c.l.b16 %v113
    %v281 = vunpack.c.l.b16 %v114
    %v282 = vunpack.c.l.b16 %v115
    %v283 = vunpack.c.l.b16 %v116
    %v284 = vunpack.c.l.b16 %v117
    %v285 = vunpack.c.l.b16 %v118
    %v286 = vunpack.c.l.b16 %v119
    %v287 = vunpack.c.l.b16 %v120
    %v288 = vunpack.c.l.b16 %v121
    %v289 = vunpack.c.l.b16 %v122
    %v290 = vunpack.c.l.b16 %v123
    %v291 = vunpack.c.l.b16 %v124
    %v292 = vunpack.c.l.b16 %v125
    %v293 = vunpack.c.l.b16 %v126
    %v294 = vunpack.c.l.b16 %v127
    %v295 = vunpack.c.l.b16 %v128
    %v296 = vunpack.c.l.b16 %v129
    %v297 = vunpack.c.l.b16 %v130
    %v298 = vunpack.c.l.b16 %v131
    %v299 = vunpack.c.l.b16 %v132
    %v300 = vunpack.c.l.b16 %v133
    %v301 = vunpack.c.l.b16 %v134
    %v302 = vunpack.c.l.b16 %v135
    %v303 = vunpack.c.l.b16 %v136
    %v304 = vunpack.c.l.b16 %v137
    %v305 = vunpack.c.l.b16 %v138
    %v306 = vunpack.c.l.b16 %v139
    %v307 = vunpack.c.l.b16 %v140
    %v308 = vunpack.c.l.b16 %v141
    %v309 = vunpack.c.l.b16 %v142
    %v310 = vunpack.c.l.b16 %v143
    %v311 = vunpack.c.l.b16 %v144
    %v312 = vunpack.c.l.b16 %v145
    %v313 = vunpack.c.l.b16 %v146
    %v314 = vunpack.c.l.b16 %v147
    %v315 = vunpack.c.l.b16 %v148
    %v316 = vunpack.c.l.b16 %v149
    %v317 = vunpack.c.l.b16 %v150
    %v318 = vunpack.c.l.b16 %v151
    %v319 = vunpack.c.l.b16 %v152
    %v320 = vunpack.c.l.b16 %v153
    %v321 = vunpack.c.l.b16 %v154
    %v322 = vunpack.c.l.b16 %v155
    %v323 = vunpack.c.l.b16 %v156
    %v324 = vunpack.c.l.b16 %v157
    %v325 = vunpack.c.l.b16 %v158
    %v326 = vunpack.c.l.b16 %v159
    %v327 = vunpack.c.l.b16 %v160
    %v328 = vunpack.c.l.b16 %v161
    %v329 = vunpack.c.l.b16 %v162
    %v330 = vunpack.c.l.b16 %v163
    %v331 = vunpack.c.l.b16 %v164
    %v332 = vunpack.c.l.b16 %v165
    %v333 = vunpack.c.l.b16 %v166
    %v334 = vunpack.c.l.b16 %v167
    %v335 = vunpack.c.l.b16 %v168
    %v336 = vunpack.c.l.b16 %v169
    %v337 = vunpack.c.l.b16 %v170
    %v338 = vunpack.c.l.b16 %v171
    %v339 = vunpack.c.l.b16 %v172
    %v340 = vunpack.c.l.b16 %v173
    %v341 = vunpack.c.l.b16 %v174
    %v342 = vunpack.c.l.b16 %v175
    %v343 = vpack.c.b16 %v264, %v263
    %v344 = vpack.c.b16 %v266, %v265
    %v345 = vpack.c.b16 %v268, %v267
    %v346 = vpack.c.b16 %v270, %v269
    %v347 = vpack.c.b16 %v272, %v271
    %v348 = vpack.c.b16 %v274, %v273
    %v349 = vpack.c.b16 %v276, %v275
    %v350 = vpack.c.b16 %v278, %v277
    %v351 = vpack.c.b16 %v280, %v279
    %v352 = vpack.c.b16 %v282, %v281
    %v353 = vpack.c.b16 %v284, %v283
    %v354 = vpack.c.b16 %v286, %v285
    %v355 = vpack.c.b16 %v288, %v287
    %v356 = vpack.c.b16 %v290, %v289
    %v357 = vpack.c.b16 %v292, %v291
    %v358 = vpack.c.b16 %v294, %v293
    %v359 = vpack.c.b16 %v296, %v295
    %v360 = vpack.c.b16 %v298, %v297
    %v361 = vpack.c.b16 %v300, %v299
    %v362 = vpack.c.b16 %v302, %v301
    %v363 = vpack.c.b16 %v304, %v303
    %v364 = vpack.c.b16 %v306, %v305
    %v365 = vpack.c.b16 %v308, %v307
    %v366 = vpack.c.b16 %v310, %v309
    %v367 = vpack.c.b16 %v312, %v311
    %v368 = vpack.c.b16 %v314, %v313
    %v369 = vpack.c.b16 %v316, %v315
    %v370 = vpack.c.b16 %v318, %v317
    %v371 = vpack.c.b16 %v320, %v319
    %v372 = vpack.c.b16 %v322, %v321
    %v373 = vpack.c.b16 %v324, %v323
    %v374 = vpack.c.b16 %v326, %v325
    %v375 = vpack.c.b16 %v328, %v327
    %v376 = vpack.c.b16 %v330, %v329
    %v377 = vpack.c.b16 %v332, %v331
    %v378 = vpack.c.b16 %v334, %v333
    %v379 = vpack.c.b16 %v336, %v335
    %v380 = vpack.c.b16 %v338, %v337
    %v381 = vpack.c.b16 %v340, %v339
    %v382 = vpack.c.b16 %v342, %v341
    %423 = vmatprep.subr.bf16.mxu0 0
    %424 = vmatpush1.bf16.msra.mxu0 %v343
    %425 = vmatprep.subr.bf16.mxu0 0
    %426 = vmatpush1.bf16.msra.mxu0 %v344
    %427 = vmatprep.subr.bf16.mxu0 0
    %428 = vmatpush1.bf16.msra.mxu0 %v345
    %429 = vmatprep.subr.bf16.mxu0 0
    %430 = vmatpush1.bf16.msra.mxu0 %v346
    %431 = vmatprep.subr.bf16.mxu0 0
    %432 = vmatpush1.bf16.msra.mxu0 %v347
    %433 = vmatprep.subr.bf16.mxu0 0
    %434 = vmatpush1.bf16.msra.mxu0 %v348
    %435 = vmatprep.subr.bf16.mxu0 0
    %436 = vmatpush1.bf16.msra.mxu0 %v349
    %437 = vmatprep.subr.bf16.mxu0 0
    %438 = vmatpush1.bf16.msra.mxu0 %v350
    %439 = vmatprep.subr.bf16.mxu0 0
    %440 = vmatpush1.bf16.msra.mxu0 %v351
    %441 = vmatprep.subr.bf16.mxu0 0
    %442 = vmatpush1.bf16.msra.mxu0 %v352
    %443 = vmatprep.subr.bf16.mxu0 0
    %444 = vmatpush1.bf16.msra.mxu0 %v353
    %445 = vmatprep.subr.bf16.mxu0 0
    %446 = vmatpush1.bf16.msra.mxu0 %v354
    %447 = vmatprep.subr.bf16.mxu0 0
    %448 = vmatpush1.bf16.msra.mxu0 %v355
    %449 = vmatprep.subr.bf16.mxu0 0
    %450 = vmatpush1.bf16.msra.mxu0 %v356
    %451 = vmatprep.subr.bf16.mxu0 0
    %452 = vmatpush1.bf16.msra.mxu0 %v357
    %453 = vmatprep.subr.bf16.mxu0 0
    %454 = vmatpush1.bf16.msra.mxu0 %v358
    %455 = vmatprep.mubr.bf16.mxu0 %v92
    %456 = vmatmul.mubr.bf16.gmra.mrb[0].mxu0 %v91
    %v457 = vpop.f32.mrb[0].mxu0
    %v458 = vadd.f32 %v181, %v457
    %v459 = vpop.f32.mrb[0].mxu0
    %v460 = vpop.f32.mrb[0].mxu0
    %v461 = vpop.f32.mrb[0].mxu0
    %462 = vdwg.mxu0
    %463 = vmatprep.subr.bf16.mxu0 0
    %464 = vmatpush1.bf16.msra.mxu0 %v359
    %465 = vmatprep.subr.bf16.mxu0 0
    %466 = vmatpush1.bf16.msra.mxu0 %v360
    %467 = vmatprep.subr.bf16.mxu0 0
    %468 = vmatpush1.bf16.msra.mxu0 %v361
    %469 = vmatprep.subr.bf16.mxu0 0
    %470 = vmatpush1.bf16.msra.mxu0 %v362
    %471 = vmatprep.subr.bf16.mxu0 0
    %472 = vmatpush1.bf16.msra.mxu0 %v363
    %473 = vmatprep.subr.bf16.mxu0 0
    %474 = vmatpush1.bf16.msra.mxu0 %v364
    %475 = vmatprep.subr.bf16.mxu0 0
    %476 = vmatpush1.bf16.msra.mxu0 %v365
    %477 = vmatprep.subr.bf16.mxu0 0
    %478 = vmatpush1.bf16.msra.mxu0 %v366
    %479 = vmatprep.subr.bf16.mxu0 0
    %480 = vmatpush1.bf16.msra.mxu0 %v367
    %481 = vmatprep.subr.bf16.mxu0 0
    %482 = vmatpush1.bf16.msra.mxu0 %v368
    %483 = vmatprep.subr.bf16.mxu0 0
    %484 = vmatpush1.bf16.msra.mxu0 %v369
    %485 = vmatprep.subr.bf16.mxu0 0
    %486 = vmatpush1.bf16.msra.mxu0 %v370
    %487 = vmatprep.subr.bf16.mxu0 0
    %488 = vmatpush1.bf16.msra.mxu0 %v371
    %489 = vmatprep.subr.bf16.mxu0 0
    %490 = vmatpush1.bf16.msra.mxu0 %v372
    %491 = vmatprep.subr.bf16.mxu0 0
    %492 = vmatpush1.bf16.msra.mxu0 %v373
    %493 = vmatprep.subr.bf16.mxu0 0
    %494 = vmatpush1.bf16.msra.mxu0 %v374
    %495 = vmatprep.mubr.bf16.mxu0 %v94
    %496 = vmatmul.mubr.bf16.gmra.mrb[0].mxu0 %v93
    %v497 = vpop.f32.mrb[0].mxu0
    %v498 = vadd.f32 %v458, %v497
    %v499 = vpop.f32.mrb[0].mxu0
    %v500 = vpop.f32.mrb[0].mxu0
    %v501 = vpop.f32.mrb[0].mxu0
    %502 = vdwg.mxu0
    %503 = vmatprep.subr.bf16.mxu0 0
    %504 = vmatpush1.bf16.msra.mxu0 %v375
    %505 = vmatprep.subr.bf16.mxu0 0
    %506 = vmatpush1.bf16.msra.mxu0 %v376
    %507 = vmatprep.subr.bf16.mxu0 0
    %508 = vmatpush1.bf16.msra.mxu0 %v377
    %509 = vmatprep.subr.bf16.mxu0 0
    %510 = vmatpush1.bf16.msra.mxu0 %v378
    %511 = vmatprep.subr.bf16.mxu0 0
    %512 = vmatpush1.bf16.msra.mxu0 %v379
    %513 = vmatprep.subr.bf16.mxu0 0
    %514 = vmatpush1.bf16.msra.mxu0 %v380
    %515 = vmatprep.subr.bf16.mxu0 0
    %516 = vmatpush1.bf16.msra.mxu0 %v381
    %517 = vmatprep.subr.bf16.mxu0 0
    %518 = vmatpush1.bf16.msra.mxu0 %v382
    %519 = vmatprep.subr.bf16.mxu0 0
    %520 = vmatpush1.bf16.msra.mxu0 0
    %521 = vmatprep.subr.bf16.mxu0 0
    %522 = vmatpush1.bf16.msra.mxu0 0
    %523 = vmatprep.subr.bf16.mxu0 0
    %524 = vmatpush1.bf16.msra.mxu0 0
    %525 = vmatprep.subr.bf16.mxu0 0
    %526 = vmatpush1.bf16.msra.mxu0 0
    %527 = vmatprep.subr.bf16.mxu0 0
    %528 = vmatpush1.bf16.msra.mxu0 0
    %529 = vmatprep.subr.bf16.mxu0 0
    %530 = vmatpush1.bf16.msra.mxu0 0
    %531 = vmatprep.subr.bf16.mxu0 0
    %532 = vmatpush1.bf16.msra.mxu0 0
    %533 = vmatprep.subr.bf16.mxu0 0
    %534 = vmatpush1.bf16.msra.mxu0 0
    %535 = vmatprep.mubr.bf16.mxu0 0
    %536 = vmatmul.mubr.bf16.gmra.mrb[0].mxu0 %v95
    %v537 = vpop.f32.mrb[0].mxu0
    %v538 = vadd.f32 %v498, %v537
    %v539 = vpop.f32.mrb[0].mxu0
    %v540 = vpop.f32.mrb[0].mxu0
    %v541 = vpop.f32.mrb[0].mxu0
    %542 = vdwg.mxu0
    %vm543 = vcmask 261120
    %544 = vst.msk [vmem:[#allocation2] sm:$0xff] %vm543, %v538
    // Predicated region
    $region22: #{tpu_custom_call.1} parent=1 // pred_check
      _
    $region23: #{tpu_custom_call.1} parent=1 // pred_check_branch
      %546 = sbr.rel (0) target = $region25
    $region24: #{tpu_custom_call.1} parent=1 // pred_region
      %s548 = ssub.s32 128, 128
      %549 = vsyncadd [#allocation3], %s548
      %s551 = sshll.u32 [#allocation2], 4
      %s552 = int_to_ptr.vmem [resolvable:$true] %s551
      %554 = dma.vmem_to_hbm [thread:$0]  %s552, 128, %s5, [#allocation3]
    $region25: #{tpu_custom_call.1} parent=1 // pred_fallthru
      _
    // Predicated region
    $region26: #{tpu_custom_call.1} parent=1 // pred_check
      _
    $region27: #{tpu_custom_call.1} parent=1 // pred_check_branch
      %556 = sbr.rel (0) target = $region29
    $region28: #{tpu_custom_call.1} parent=1 // pred_region
      %557 = dma.done [#allocation3], 128
    $region29: #{tpu_custom_call.1} parent=1 // pred_fallthru
      _
    %558 = vsyncpa [#allocation3], 1

</llo_original>
